<compile_context>
chip_gen: v6e
topology: v6e:2x2x1
jax: 0.10.0
libtpu: 0.0.40
codegen_flags: <defaults>
</compile_context>

<pallas_src>
import functools

import jax
import jax.numpy as jnp
from jax.experimental import pallas as pl
from jax.experimental.pallas import tpu as pltpu

NUM_CLASSES = 4
CLASS_WEIGHTS = (1.0, 1.5, 1.2, 1.2)   # nn.CrossEntropyLoss(weight=...)
COS_EPS = 1e-8                         # torch.nn.CosineSimilarity default eps


def _cosine_loss_kernel(featT_ref, avg_ref, outT_ref, labT_ref, selT_ref,
                        fg_ref, w_ref, loss_ref, *, thresh, inv_n):
    featT   = featT_ref[...]   # (D, N)  feature dim on sublanes, patches on lanes
    avg_u   = avg_ref[...]     # (C, D)  unit-normalized class prototypes
    logitsT = outT_ref[...]    # (C, N)  classes on sublanes, patches on lanes
    labT    = labT_ref[...]    # (C, N)  per-patch raw label row (target when pseudo==1)
    selT    = selT_ref[...]    # (C, N)  per-patch one_hot(argmax(label))
    fg      = fg_ref[...]      # (1, N)  1.0 if that patch's image is foreground
    w       = w_ref[...]       # (C, 1)  class weights

    C = logitsT.shape[0]

    # ---- cosine similarity of every patch against every (unit) prototype ----
    # prototypes are pre-normalized (norm clamped at eps, like torch), so
    # cos = <f, a_unit> * rsqrt(max(||f||^2, eps^2))  -- rsqrt goes to the EUP.
    dots = jnp.dot(avg_u, featT, preferred_element_type=jnp.float32)     # (C, N)
    feat_sq = jnp.sum(featT * featT, axis=0, keepdims=True)              # (1, N)
    inv_feat = jax.lax.rsqrt(jnp.maximum(feat_sq, COS_EPS * COS_EPS))    # (1, N)
    sims = dots * inv_feat                                               # (C, N)

    sim_back = sims[0:1, :]                                              # (1, N)
    sim_sea = jnp.sum(sims * selT, axis=0, keepdims=True)                # (1, N)

    # pseudo = ((back <= sea) OR (back <= thresh)) if foreground image else 0
    pseudo = jnp.logical_and(
        jnp.logical_or(sim_back <= sim_sea, sim_back <= thresh),
        fg > 0.0)                                                        # (1, N)

    # target = image's label row if pseudo else background one-hot (class 0)
    bg_col = (jax.lax.broadcasted_iota(jnp.int32, (C, 1), 0) == 0).astype(jnp.float32)
    target = jnp.where(pseudo, labT, bg_col)                             # (C, N)

    # ---- softmax(outputs) over classes (as in the torch module) ... ----
    m = jnp.max(logitsT, axis=0, keepdims=True)
    e = jnp.exp(logitsT - m)
    soft = e * pl.reciprocal(jnp.sum(e, axis=0, keepdims=True))          # exact

    # ... then CrossEntropyLoss applies log_softmax to those softmax values
    # (faithful "double softmax" of the original module).
    sm_max = jnp.max(soft, axis=0, keepdims=True)
    lse = sm_max + jnp.log(jnp.sum(jnp.exp(soft - sm_max), axis=0, keepdims=True))
    log_sm = soft - lse                                                  # (C, N)

    # weighted soft-target NLL; CE(mean) with probability targets divides by N.
    loss_ref[0, 0] = -jnp.sum(w * target * log_sm) * inv_n


def cosine_loss(features, average_features, outputs, labels_onehot, thresh=0.6):
    B, P, D = features.shape
    C = average_features.shape[0]
    assert C == NUM_CLASSES
    N = B * P

    # ---- layout plumbing / grid-invariant hoisting (all tiny) ----
    featT = features.reshape(N, D).T                                   # (D, N)
    outT = outputs.reshape(N, C).T                                     # (C, N)

    # unit-normalize prototypes once (torch clamps each norm at eps separately)
    avg_norm = jnp.sqrt(jnp.sum(average_features * average_features, axis=1, keepdims=True))
    avg_unit = average_features / jnp.maximum(avg_norm, COS_EPS)       # (C, D)

    # per-image label bookkeeping expanded per patch (avoids in-kernel argmax/gather)
    label_idx = jnp.argmax(labels_onehot, axis=1)                      # (B,)
    sel = jax.nn.one_hot(label_idx, C, dtype=jnp.float32)              # (B, C)
    labT = jnp.repeat(labels_onehot.astype(jnp.float32), P, axis=0).T  # (C, N)
    selT = jnp.repeat(sel, P, axis=0).T                                # (C, N)
    fg = jnp.repeat((label_idx > 0).astype(jnp.float32), P).reshape(1, N)  # (1, N)

    w_col = jnp.asarray(CLASS_WEIGHTS, jnp.float32).reshape(C, 1)      # (C, 1)

    kernel = functools.partial(_cosine_loss_kernel, thresh=thresh, inv_n=1.0 / N)

    vmem = pl.BlockSpec(memory_space=pltpu.MemorySpace.VMEM)
    loss = pl.pallas_call(
        kernel,
        out_shape=jax.ShapeDtypeStruct((1, 1), jnp.float32),
        in_specs=[vmem, vmem, vmem, vmem, vmem, vmem, vmem],
        out_specs=pl.BlockSpec(memory_space=pltpu.MemorySpace.SMEM),
    )(featT, avg_unit, outT, labT, selT, fg, w_col)
    return loss[0, 0]


def cosine_loss_ref(features, average_features, outputs, labels_onehot, thresh=0.6):
    """Pure-JAX reference replicating the PyTorch forward."""
    B, P, D = features.shape
    C = average_features.shape[0]
    w = jnp.asarray(CLASS_WEIGHTS, jnp.float32)
    feat_n = jnp.maximum(jnp.sqrt(jnp.sum(features ** 2, axis=-1)), COS_EPS)            # (B, P)
    avg_n = jnp.maximum(jnp.sqrt(jnp.sum(average_features ** 2, axis=-1)), COS_EPS)     # (C,)
    dots = jnp.einsum("bpd,cd->bpc", features, average_features)
    sims = dots / (feat_n[:, :, None] * avg_n[None, None, :])                           # (B, P, C)
    label_idx = jnp.argmax(labels_onehot, axis=1)                                       # (B,)
    is_fg = label_idx > 0
    sim_back = sims[:, :, 0]
    sim_sea = jnp.take_along_axis(sims, label_idx[:, None, None], axis=2)[:, :, 0]
    pseudo = ((sim_back <= sim_sea) | (sim_back <= thresh)) & is_fg[:, None]
    bg = jnp.zeros((C,), jnp.float32).at[0].set(1.0)
    pseudo_onehot = jnp.where(pseudo[:, :, None], labels_onehot[:, None, :],
                              bg[None, None, :])
    soft = jax.nn.softmax(outputs, axis=-1)
    log_sm = jax.nn.log_softmax(soft, axis=-1)
    per = -jnp.sum(w[None, None, :] * pseudo_onehot * log_sm, axis=-1)
    return jnp.mean(per)


if __name__ == "__main__":
    B, P, D, C = 2, 45, 32, NUM_CLASSES   # num_patches=45 as in the module default
    key = jax.random.PRNGKey(0)
    k1, k2, k3 = jax.random.split(key, 3)
    features = jax.random.normal(k1, (B, P, D), jnp.float32)
    average_features = jax.random.normal(k2, (C, D), jnp.float32)
    outputs = jax.random.normal(k3, (B, P, C), jnp.float32)
    # one background image (class 0) and one foreground image (class 2)
    labels_onehot = jax.nn.one_hot(jnp.array([0, 2]), C, dtype=jnp.float32)

    loss = cosine_loss(features, average_features, outputs, labels_onehot)
    loss = jax.block_until_ready(loss)
    ref = cosine_loss_ref(features, average_features, outputs, labels_onehot)
    assert jnp.allclose(loss, ref, rtol=1e-5, atol=1e-5), (loss, ref)
    print("KERNEL_OK")
</pallas_src>

<mosaic_0001>
module attributes {stable_mosaic.version = 11 : i64} {
  func.func @_cosine_loss_kernel(%arg0: memref<32x90xf32, #tpu.memory_space<vmem>>, %arg1: memref<4x32xf32, #tpu.memory_space<vmem>>, %arg2: memref<4x90xf32, #tpu.memory_space<vmem>>, %arg3: memref<4x90xf32, #tpu.memory_space<vmem>>, %arg4: memref<4x90xf32, #tpu.memory_space<vmem>>, %arg5: memref<1x90xf32, #tpu.memory_space<vmem>>, %arg6: memref<4x1xf32, #tpu.memory_space<vmem>>, %arg7: memref<1x1xf32, #tpu.memory_space<smem>>) attributes {dimension_semantics = [], scalar_prefetch = 0 : i64, scratch_operands = 0 : i64, tpu.core_type = #tpu.core_type<tc>} {
    %c0 = arith.constant 0 : index
    %c0_0 = arith.constant 0 : index
    %0 = vector.load %arg0[%c0, %c0_0] : memref<32x90xf32, #tpu.memory_space<vmem>>, vector<32x90xf32>
    %c0_1 = arith.constant 0 : index
    %c0_2 = arith.constant 0 : index
    %1 = vector.load %arg1[%c0_1, %c0_2] : memref<4x32xf32, #tpu.memory_space<vmem>>, vector<4x32xf32>
    %c0_3 = arith.constant 0 : index
    %c0_4 = arith.constant 0 : index
    %2 = vector.load %arg2[%c0_3, %c0_4] : memref<4x90xf32, #tpu.memory_space<vmem>>, vector<4x90xf32>
    %c0_5 = arith.constant 0 : index
    %c0_6 = arith.constant 0 : index
    %3 = vector.load %arg3[%c0_5, %c0_6] : memref<4x90xf32, #tpu.memory_space<vmem>>, vector<4x90xf32>
    %c0_7 = arith.constant 0 : index
    %c0_8 = arith.constant 0 : index
    %4 = vector.load %arg4[%c0_7, %c0_8] : memref<4x90xf32, #tpu.memory_space<vmem>>, vector<4x90xf32>
    %c0_9 = arith.constant 0 : index
    %c0_10 = arith.constant 0 : index
    %5 = vector.load %arg5[%c0_9, %c0_10] : memref<1x90xf32, #tpu.memory_space<vmem>>, vector<1x90xf32>
    %c0_11 = arith.constant 0 : index
    %c0_12 = arith.constant 0 : index
    %6 = vector.load %arg6[%c0_11, %c0_12] : memref<4x1xf32, #tpu.memory_space<vmem>>, vector<4x1xf32>
    %cst = arith.constant dense<0.000000e+00> : vector<4x90xf32>
    %7 = tpu.matmul %1, %0, %cst {dimension_numbers = #tpu.dot_dimension_numbers<[1], [0], [0], [1], [0, 0, 1, 1], [], []>} : vector<4x32xf32>, vector<32x90xf32>, vector<4x90xf32> -> vector<4x90xf32>
    %8 = arith.mulf %0, %0 : vector<32x90xf32>
    %cst_13 = arith.constant dense<0.000000e+00> : vector<90xf32>
    %9 = vector.multi_reduction <add>, %8, %cst_13 [0] : vector<32x90xf32> to vector<90xf32>
    %10 = vector.shape_cast %9 : vector<90xf32> to vector<1x90xf32>
    %cst_14 = arith.constant 1.000000e-16 : f32
    %11 = vector.broadcast %cst_14 : f32 to vector<1x90xf32>
    %12 = arith.maximumf %10, %11 : vector<1x90xf32>
    %13 = math.rsqrt %12 : vector<1x90xf32>
    %14 = vector.broadcast %13 : vector<1x90xf32> to vector<4x90xf32>
    %15 = arith.mulf %7, %14 : vector<4x90xf32>
    %16 = vector.extract_strided_slice %15 {offsets = [0, 0], sizes = [1, 90], strides = [1, 1]} : vector<4x90xf32> to vector<1x90xf32>
    %17 = arith.mulf %15, %4 : vector<4x90xf32>
    %cst_15 = arith.constant dense<0.000000e+00> : vector<90xf32>
    %18 = vector.multi_reduction <add>, %17, %cst_15 [0] : vector<4x90xf32> to vector<90xf32>
    %19 = vector.shape_cast %18 : vector<90xf32> to vector<1x90xf32>
    %20 = arith.cmpf ole, %16, %19 : vector<1x90xf32>
    %cst_16 = arith.constant 6.000000e-01 : f32
    %21 = vector.broadcast %cst_16 : f32 to vector<1x90xf32>
    %22 = arith.cmpf ole, %16, %21 : vector<1x90xf32>
    %23 = arith.ori %20, %22 : vector<1x90xi1>
    %cst_17 = arith.constant 0.000000e+00 : f32
    %24 = vector.broadcast %cst_17 : f32 to vector<1x90xf32>
    %25 = arith.cmpf ogt, %5, %24 : vector<1x90xf32>
    %26 = arith.andi %23, %25 : vector<1x90xi1>
    %27 = tpu.iota {dimensions = array<i32: 0>} : vector<4x1xi32>
    %c0_i32 = arith.constant 0 : i32
    %28 = vector.broadcast %c0_i32 : i32 to vector<4x1xi32>
    %29 = arith.cmpi eq, %27, %28 : vector<4x1xi32>
    %30 = arith.extui %29 : vector<4x1xi1> to vector<4x1xi32>
    %31 = arith.sitofp %30 : vector<4x1xi32> to vector<4x1xf32>
    %32 = vector.shape_cast %26 : vector<1x90xi1> to vector<1x90xi1>
    %33 = vector.broadcast %32 : vector<1x90xi1> to vector<4x90xi1>
    %34 = vector.shape_cast %31 : vector<4x1xf32> to vector<4x1xf32>
    %35 = vector.broadcast %34 : vector<4x1xf32> to vector<4x90xf32>
    %36 = arith.select %33, %3, %35 : vector<4x90xi1>, vector<4x90xf32>
    %cst_18 = arith.constant dense<0xFF800000> : vector<90xf32>
    %37 = vector.multi_reduction <maximumf>, %2, %cst_18 [0] : vector<4x90xf32> to vector<90xf32>
    %38 = vector.shape_cast %37 : vector<90xf32> to vector<1x90xf32>
    %39 = vector.broadcast %38 : vector<1x90xf32> to vector<4x90xf32>
    %40 = arith.subf %2, %39 : vector<4x90xf32>
    %41 = math.exp %40 : vector<4x90xf32>
    %cst_19 = arith.constant dense<0.000000e+00> : vector<90xf32>
    %42 = vector.multi_reduction <add>, %41, %cst_19 [0] : vector<4x90xf32> to vector<90xf32>
    %43 = vector.shape_cast %42 : vector<90xf32> to vector<1x90xf32>
    %44 = tpu.reciprocal %43 : vector<1x90xf32> -> vector<1x90xf32>
    %45 = vector.broadcast %44 : vector<1x90xf32> to vector<4x90xf32>
    %46 = arith.mulf %41, %45 : vector<4x90xf32>
    %cst_20 = arith.constant dense<0xFF800000> : vector<90xf32>
    %47 = vector.multi_reduction <maximumf>, %46, %cst_20 [0] : vector<4x90xf32> to vector<90xf32>
    %48 = vector.shape_cast %47 : vector<90xf32> to vector<1x90xf32>
    %49 = vector.broadcast %48 : vector<1x90xf32> to vector<4x90xf32>
    %50 = arith.subf %46, %49 : vector<4x90xf32>
    %51 = math.exp %50 : vector<4x90xf32>
    %cst_21 = arith.constant dense<0.000000e+00> : vector<90xf32>
    %52 = vector.multi_reduction <add>, %51, %cst_21 [0] : vector<4x90xf32> to vector<90xf32>
    %53 = vector.shape_cast %52 : vector<90xf32> to vector<1x90xf32>
    %54 = math.log %53 : vector<1x90xf32>
    %55 = arith.addf %48, %54 : vector<1x90xf32>
    %56 = vector.broadcast %55 : vector<1x90xf32> to vector<4x90xf32>
    %57 = arith.subf %46, %56 : vector<4x90xf32>
    %58 = vector.broadcast %6 : vector<4x1xf32> to vector<4x90xf32>
    %59 = arith.mulf %58, %36 : vector<4x90xf32>
    %60 = arith.mulf %59, %57 : vector<4x90xf32>
    %61 = vector.shape_cast %60 : vector<4x90xf32> to vector<1x4x90xf32>
    %cst_22 = arith.constant dense<0.000000e+00> : vector<1xf32>
    %62 = vector.multi_reduction <add>, %61, %cst_22 [1, 2] : vector<1x4x90xf32> to vector<1xf32>
    %63 = vector.shape_cast %62 : vector<1xf32> to vector<1x1x1xf32>
    %64 = vector.extract %63[0, 0, 0] : f32 from vector<1x1x1xf32>
    %cst_23 = arith.constant 0.000000e+00 : f32
    %65 = arith.subf %cst_23, %64 : f32
    %cst_24 = arith.constant 0.0111111114 : f32
    %66 = arith.mulf %65, %cst_24 : f32
    %c0_25 = arith.constant 0 : index
    %c0_26 = arith.constant 0 : index
    %67 = memref.load %arg7[%c0_25, %c0_26] : memref<1x1xf32, #tpu.memory_space<smem>>
    memref.store %66, %arg7[%c0_25, %c0_26] : memref<1x1xf32, #tpu.memory_space<smem>>
    return
  }
}

</mosaic_0001>

<llo_original>
// kernel: tpu_custom_call.1
$region0: #{tpu_custom_call.1}
  #allocation0 [shape = 'u32[]', space=smem, size = 0x4, offset = 0x4, fixed_abs, tag = 'smem constant byte address 0x4 - core index']
  #allocation1 [shape = 'u32[144,128]{1,0:T(1,128)}', space=vmem, size = 0x12000, scoped, tag = 'internal scratch']
  %s0 = inlined_call_operand.hbm [shape: f32[32,90], index: 0, kind: input, shape index: {}]
  %s1 = inlined_call_operand.vmem [shape: f32[4,32], index: 1, kind: input, shape index: {}]
  %s2 = inlined_call_operand.vmem [shape: f32[4,90], index: 2, kind: input, shape index: {}]
  %s3 = inlined_call_operand.hbm [shape: f32[4,90], index: 3, kind: input, shape index: {}]
  %s4 = inlined_call_operand.vmem [shape: f32[4,90], index: 4, kind: input, shape index: {}]
  %s5 = inlined_call_operand.vmem [shape: f32[1,90], index: 5, kind: input, shape index: {}]
  %s6 = inlined_call_operand.vmem [shape: f32[4,1], index: 6, kind: input, shape index: {}]
  %s7 = inlined_call_operand.hbm [shape: f32[1,1], index: 7, kind: output, shape index: {}]
  %s8 = sld [smem:[#allocation0]]
  $region46: #{tpu_custom_call.1} parent=0
    _
  %s10 = ssub.s32 1, %s8
  %s11 = scalar_select 0, %s10, %s8
  $region1: #{tpu_custom_call.1} parent=0
    #allocation2 [shape = 'u8[16384]{0}', space=vmem, size = 0x4000, scoped, tag = 'input window, operand 0, single buffered']
    #allocation3 [shape = 's32[1]{0}', space=sflag, size = 0x4, scoped, tag = 'scoped memory for tpu_custom_call.1']
    #allocation4 [shape = 's32[1]{0}', space=sflag, size = 0x4, scoped, tag = 'scoped memory for tpu_custom_call.1']
    #allocation5 [shape = 'u8[2048]{0}', space=vmem, size = 0x800, scoped, tag = 'input window, operand 3, single buffered']
    #allocation6 [shape = 's32[1]{0}', space=sflag, size = 0x4, scoped, tag = 'scoped memory for tpu_custom_call.1']
    #allocation7 [shape = 'u8[512]{0}', space=smem, size = 0x200, scoped, tag = 'output window, operand 0, single buffered']
    %12 = vsyncpa [#allocation3], 0
    %13 = vsyncpa [#allocation6], 0
    %14 = vsyncpa [#allocation4], 0
    // Predicated region
    $region2: #{tpu_custom_call.1} parent=1 // pred_check
      _
    $region3: #{tpu_custom_call.1} parent=1 // pred_check_branch
      %16 = sbr.rel (0) target = $region5
    $region4: #{tpu_custom_call.1} parent=1 // pred_region
      %s18 = ssub.s32 512, 512
      %19 = vsyncadd [#allocation3], %s18
      %s20 = sshll.u32 [#allocation2], 4
      %s21 = int_to_ptr.vmem [resolvable:$true] %s20
      %26 = dma.hbm_to_vmem [thread:$0]  %s0, 512, %s21, [#allocation3], 128, 128, 8
    $region5: #{tpu_custom_call.1} parent=1 // pred_fallthru
      _
    // Predicated region
    $region6: #{tpu_custom_call.1} parent=1 // pred_check
      _
    $region7: #{tpu_custom_call.1} parent=1 // pred_check_branch
      %28 = sbr.rel (0) target = $region9
    $region8: #{tpu_custom_call.1} parent=1 // pred_region
      _
    $region9: #{tpu_custom_call.1} parent=1 // pred_fallthru
      _
    // Predicated region
    $region10: #{tpu_custom_call.1} parent=1 // pred_check
      _
    $region11: #{tpu_custom_call.1} parent=1 // pred_check_branch
      %30 = sbr.rel (0) target = $region13
    $region12: #{tpu_custom_call.1} parent=1 // pred_region
      _
    $region13: #{tpu_custom_call.1} parent=1 // pred_fallthru
      _
    // Predicated region
    $region14: #{tpu_custom_call.1} parent=1 // pred_check
      _
    $region15: #{tpu_custom_call.1} parent=1 // pred_check_branch
      %32 = sbr.rel (0) target = $region17
    $region16: #{tpu_custom_call.1} parent=1 // pred_region
      %s34 = ssub.s32 64, 64
      %35 = vsyncadd [#allocation6], %s34
      %s37 = sshll.u32 [#allocation5], 4
      %s38 = int_to_ptr.vmem [resolvable:$true] %s37
      %40 = dma.hbm_to_vmem [thread:$0]  %s3, 64, %s38, [#allocation6]
    $region17: #{tpu_custom_call.1} parent=1 // pred_fallthru
      _
    // Predicated region
    $region18: #{tpu_custom_call.1} parent=1 // pred_check
      _
    $region19: #{tpu_custom_call.1} parent=1 // pred_check_branch
      %42 = sbr.rel (0) target = $region21
    $region20: #{tpu_custom_call.1} parent=1 // pred_region
      _
    $region21: #{tpu_custom_call.1} parent=1 // pred_fallthru
      _
    // Predicated region
    $region22: #{tpu_custom_call.1} parent=1 // pred_check
      _
    $region23: #{tpu_custom_call.1} parent=1 // pred_check_branch
      %44 = sbr.rel (0) target = $region25
    $region24: #{tpu_custom_call.1} parent=1 // pred_region
      _
    $region25: #{tpu_custom_call.1} parent=1 // pred_fallthru
      _
    // Predicated region
    $region26: #{tpu_custom_call.1} parent=1 // pred_check
      _
    $region27: #{tpu_custom_call.1} parent=1 // pred_check_branch
      %46 = sbr.rel (0) target = $region29
    $region28: #{tpu_custom_call.1} parent=1 // pred_region
      _
    $region29: #{tpu_custom_call.1} parent=1 // pred_fallthru
      _
    // Predicated region
    $region30: #{tpu_custom_call.1} parent=1 // pred_check
      _
    $region31: #{tpu_custom_call.1} parent=1 // pred_check_branch
      %48 = sbr.rel (0) target = $region33
    $region32: #{tpu_custom_call.1} parent=1 // pred_region
      %49 = dma.done [#allocation3], 512
    $region33: #{tpu_custom_call.1} parent=1 // pred_fallthru
      _
    // Predicated region
    $region34: #{tpu_custom_call.1} parent=1 // pred_check
      _
    $region35: #{tpu_custom_call.1} parent=1 // pred_check_branch
      %51 = sbr.rel (0) target = $region37
    $region36: #{tpu_custom_call.1} parent=1 // pred_region
      %52 = dma.done [#allocation6], 64
    $region37: #{tpu_custom_call.1} parent=1 // pred_fallthru
      _
    %v53 = vld [vmem:[#allocation2] sm:$0xff]
    %v54 = vld [vmem:[#allocation2 + $0x8] sm:$0xff]
    %v55 = vld [vmem:[#allocation2 + $0x10] sm:$0xff]
    %v56 = vld [vmem:[#allocation2 + $0x18] sm:$0xff]
    %v57 = vld [vmem:[%s1] sm:$0xf]
    %v58 = vld [vmem:[%s2] sm:$0xf]
    %v59 = vld [vmem:[#allocation5] sm:$0xf]
    %v60 = vld [vmem:[%s4] sm:$0xf]
    %v61 = vld [vmem:[%s5] sm:$0x1]
    %v62 = vld [vmem:[%s6] sm:$0xf]
    %vm63 = vcmask 261120
    %v65 = vsel %vm63, %v57, 0
    %67 = vmatprep.subr.mxu0 0.0
    %68 = vmatpush1.msra.mxu0 0.0
    %69 = vmatprep.subr.mxu0 0.0
    %70 = vmatpush1.msra.mxu0 0.0
    %71 = vmatprep.subr.mxu0 0.0
    %72 = vmatpush1.msra.mxu0 0.0
    %73 = vmatprep.subr.mxu0 0.0
    %74 = vmatpush1.msra.mxu0 0.0
    %75 = vmatprep.subr.mxu0 0.0
    %76 = vmatpush1.msra.mxu0 0.0
    %77 = vmatprep.subr.mxu0 0.0
    %78 = vmatpush1.msra.mxu0 0.0
    %79 = vmatprep.subr.mxu0 0.0
    %80 = vmatpush1.msra.mxu0 0.0
    %81 = vmatprep.subr.mxu0 0.0
    %82 = vmatpush1.msra.mxu0 0.0
    %83 = vmatprep.subr.mxu0 0.0
    %84 = vmatpush1.msra.mxu0 0.0
    %85 = vmatprep.subr.mxu0 0.0
    %86 = vmatpush1.msra.mxu0 0.0
    %87 = vmatprep.subr.mxu0 0.0
    %88 = vmatpush1.msra.mxu0 0.0
    %89 = vmatprep.subr.mxu0 0.0
    %90 = vmatpush1.msra.mxu0 0.0
    %91 = vmatprep.subr.mxu0 0.0
    %92 = vmatpush1.msra.mxu0 %v56
    %93 = vmatprep.subr.mxu0 0.0
    %94 = vmatpush1.msra.mxu0 %v55
    %95 = vmatprep.subr.mxu0 0.0
    %96 = vmatpush1.msra.mxu0 %v54
    %97 = vmatprep.subr.mxu0 0.0
    %98 = vmatpush1.msra.mxu0 %v53
    %99 = vmatprep.subr.mxu0 0.0
    %100 = vmatpush2.msra.mxu0 0.0
    %101 = vmatprep.subr.mxu0 0.0
    %102 = vmatpush2.msra.mxu0 0.0
    %103 = vmatprep.subr.mxu0 0.0
    %104 = vmatpush2.msra.mxu0 0.0
    %105 = vmatprep.subr.mxu0 0.0
    %106 = vmatpush2.msra.mxu0 0.0
    %107 = vmatprep.subr.mxu0 0.0
    %108 = vmatpush2.msra.mxu0 0.0
    %109 = vmatprep.subr.mxu0 0.0
    %110 = vmatpush2.msra.mxu0 0.0
    %111 = vmatprep.subr.mxu0 0.0
    %112 = vmatpush2.msra.mxu0 0.0
    %113 = vmatprep.subr.mxu0 0.0
    %114 = vmatpush2.msra.mxu0 0.0
    %115 = vmatprep.subr.mxu0 0.0
    %116 = vmatpush2.msra.mxu0 0.0
    %117 = vmatprep.subr.mxu0 0.0
    %118 = vmatpush2.msra.mxu0 0.0
    %119 = vmatprep.subr.mxu0 0.0
    %120 = vmatpush2.msra.mxu0 0.0
    %121 = vmatprep.subr.mxu0 0.0
    %122 = vmatpush2.msra.mxu0 0.0
    %123 = vmatprep.subr.mxu0 0.0
    %124 = vmatpush2.msra.mxu0 0.0
    %125 = vmatprep.subr.mxu0 0.0
    %126 = vmatpush2.msra.mxu0 0.0
    %127 = vmatprep.subr.mxu0 0.0
    %128 = vmatpush2.msra.mxu0 0.0
    %129 = vmatprep.subr.mxu0 0.0
    %130 = vmatpush2.msra.mxu0 0.0
    %131 = vmatprep.mubr.f32.mxu0 0.0
    %132 = vmatmul.mubr.f32.gmra.mxu0 %v65
    %v133 = vpop.f32.mrf.mxu0
    %v134 = vadd.f32 0.0, %v133
    %v135 = vpop.f32.mrf.mxu0
    %136 = vdwg.mxu0
    %v137 = vmul.f32 %v53, %v53
    %v138 = vmul.f32 %v54, %v54
    %v139 = vmul.f32 %v55, %v55
    %v140 = vmul.f32 %v56, %v56
    %vm141 = vcmask 736256
    %v142 = vsel %vm141, %v137, 0.0
    %v143 = vsel %vm141, %v138, 0.0
    %v144 = vadd.f32 %v142, %v143
    %v145 = vsel %vm141, %v139, 0.0
    %v146 = vadd.f32 %v144, %v145
    %v147 = vsel %vm141, %v140, 0.0
    %v148 = vadd.f32 %v146, %v147
    %v149 = vrot.slane %v148, 4
    %v150 = vadd.f32 %v148, %v149
    %v151 = vrot.slane %v150, 2
    %v152 = vadd.f32 %v150, %v151
    %v153 = vrot.slane %v152, 1
    %v154 = vadd.f32 %v152, %v153
    %v155 = vmax.f32 %v154, 1e-16
    %v156 = vrsqrt.pop %v155
    %v157 = vmul.f32 %v134, %v156
    %v158 = vmul.f32 %v157, %v60
    %vm159 = vcmask 732160
    %v160 = vsel %vm159, %v158, 0.0
    %v161 = vrot.slane %v160, 4
    %v162 = vadd.f32 %v160, %v161
    %v163 = vrot.slane %v162, 2
    %v164 = vadd.f32 %v162, %v163
    %v165 = vrot.slane %v164, 1
    %v166 = vadd.f32 %v164, %v165
    %vm167 = vcmp.le.f32.partialorder %v157, %v166
    %vm168 = vcmp.le.f32.partialorder %v157, 0.6
    %vm169 = vmor %vm167, %vm168
    %vm170 = vcmp.gt.f32.partialorder %v61, 0.0
    %vm171 = vmand %vm169, %vm170
    %v172 = vlaneseq
    %v173 = vshrl.u32 %v172, 7
    %vm174 = vcmp.eq.s32.totalorder %v173, 0
    %v175 = vsel %vm174, 1, 0
    %v176 = vcvt.s32.f32 %v175
    %v177 = vsel %vm171, 1, 0
    %v178 = vlaneseq
    %v179 = vshrl.u32 %v178, 7
    %v180 = vsub.s32 0, %v179
    %v181 = vrot.slane %v177, %v180
    %vm182 = vcmp.eq.s32.totalorder %v181, 1
    %v183 = vsel %vm182, %v59, %v176
    %v184 = vsel %vm159, %v58, -inf
    %v185 = vrot.slane %v184, 4
    %v186 = vmax.f32 %v184, %v185
    %v187 = vrot.slane %v186, 2
    %v188 = vmax.f32 %v186, %v187
    %v189 = vrot.slane %v188, 1
    %v190 = vmax.f32 %v188, %v189
    %v191 = vsub.f32 %v58, %v190
    %v192 = vmul.f32 %v191, 1.442695
    %v193 = vpow.pop %v192
    %v194 = vsel %vm159, %v193, 0.0
    %v195 = vrot.slane %v194, 4
    %v196 = vadd.f32 %v194, %v195
    %v197 = vrot.slane %v196, 2
    %v198 = vadd.f32 %v196, %v197
    %v199 = vrot.slane %v198, 1
    %v200 = vadd.f32 %v198, %v199
    %v201 = vrcp.pop %v200
    %v202 = vmul.f32 %v193, %v201
    %v203 = vsel %vm159, %v202, -inf
    %v204 = vrot.slane %v203, 4
    %v205 = vmax.f32 %v203, %v204
    %v206 = vrot.slane %v205, 2
    %v207 = vmax.f32 %v205, %v206
    %v208 = vrot.slane %v207, 1
    %v209 = vmax.f32 %v207, %v208
    %v210 = vsub.f32 %v202, %v209
    %v211 = vmul.f32 %v210, 1.442695
    %v212 = vpow.pop %v211
    %v213 = vsel %vm159, %v212, 0.0
    %v214 = vrot.slane %v213, 4
    %v215 = vadd.f32 %v213, %v214
    %v216 = vrot.slane %v215, 2
    %v217 = vadd.f32 %v215, %v216
    %v218 = vrot.slane %v217, 1
    %v219 = vadd.f32 %v217, %v218
    %v220 = vlog2.pop %v219
    %v221 = vmul.f32 %v220, 0.6931472
    %v222 = vadd.f32 %v209, %v221
    %v223 = vsub.f32 %v202, %v222
    %225 = vset.pattern.permute.xlu0 0
    %226 = vperm.xlu0 %225, %v62
    %v227 = vpop.permute.xlu0 %226
    %v229 = vmul.f32 %v227, %v183
    %v230 = vmul.f32 %v229, %v223
    %v231 = vsel %vm159, %v230, 0.0
    %232 = vadd.xlane.f32.xlu0 %v231
    %v233 = vpop.xlane.xlu0 %232
    %v234 = vrot.slane %v233, 4
    %v235 = vadd.f32 %v233, %v234
    %v236 = vrot.slane %v235, 2
    %v237 = vadd.f32 %v235, %v236
    %v238 = vrot.slane %v237, 1
    %v239 = vadd.f32 %v237, %v238
    %s240 = vtos %v239
    %s241 = ssub.f32 0.0, %s240
    %s242 = smul.f32 %s241, 0.011111111
    %s243 = scalar_lea.smem [#allocation7], 0
    %244 = sst [smem:[%s243]] %s242
    // Predicated region
    $region38: #{tpu_custom_call.1} parent=1 // pred_check
      _
    $region39: #{tpu_custom_call.1} parent=1 // pred_check_branch
      %246 = sbr.rel (0) target = $region41
    $region40: #{tpu_custom_call.1} parent=1 // pred_region
      %s248 = ssub.s32 16, 16
      %249 = vsyncadd [#allocation4], %s248
      %252 = dma.smem_to_hbm [#allocation7], 16, %s7, [#allocation4]
    $region41: #{tpu_custom_call.1} parent=1 // pred_fallthru
      _
    // Predicated region
    $region42: #{tpu_custom_call.1} parent=1 // pred_check
      _
    $region43: #{tpu_custom_call.1} parent=1 // pred_check_branch
      %254 = sbr.rel (0) target = $region45
    $region44: #{tpu_custom_call.1} parent=1 // pred_region
      %255 = dma.done [#allocation4], 16
    $region45: #{tpu_custom_call.1} parent=1 // pred_fallthru
      _
    %256 = sfence
    %257 = vsyncpa [#allocation3], 1
    %258 = vsyncpa [#allocation6], 1
    %259 = vsyncpa [#allocation4], 1

</llo_original>
